<compile_context>
chip_gen: v5e
topology: v5e:2x2
jax: 0.10.0
libtpu: 0.0.40
codegen_flags: <defaults>
</compile_context>

<pallas_src>
import jax
import jax.numpy as jnp
import numpy as np
from jax.experimental import pallas as pl
from jax.experimental.pallas import tpu as pltpu


# --------------------------------------------------------------------------
# Kernel
# --------------------------------------------------------------------------
def _make_kernel(Nb, H, merged, wco):
    """Build the fused UpBlok kernel for a fixed batch sub-tile Nb."""
    B = H + 2                 # per-image scratch block (1-row zero halo top/bot)
    R = Nb * B - 2            # rows of the banded-matmul operands

    def kernel(xu_ref, xs_ref, w1u_ref, w1s_ref, b1_ref, w3_ref, b3_ref,
               wd_ref, bd_ref, o_ref, s1_ref, s2_ref):
        # xu_ref : (Nb*H, W*c_up)   bf16   rows = (image k, row i)
        # xs_ref : (Nb*H, W*c_sc)   bf16
        # o_ref  : (Nb*H, 4*W*cout) f32    lanes = (parity a, j, parity b, co)
        # s1_ref : (Nb*(H+2), W*cin)  bf16 scratch (zero halo rows per image)
        # s2_ref : (Nb*(H+2), W*cout) bf16 scratch

        # Zero the scratch every step: the per-image border rows are the
        # H-direction zero padding; interiors are fully overwritten below.
        # (Not gated on program_id: the batch axis is "parallel" / megacore.)
        s1_ref[...] = jnp.zeros_like(s1_ref)
        s2_ref[...] = jnp.zeros_like(s2_ref)

        # ---- conv1x1 + ReLU: channel-concat folded into two row-block
        # matmuls over all Nb*H rows at once (M = Nb*H). ----------------------
        y1 = jnp.dot(xu_ref[...], w1u_ref[...],
                     preferred_element_type=jnp.float32)
        y1 = y1 + jnp.dot(xs_ref[...], w1s_ref[...],
                          preferred_element_type=jnp.float32)
        y1 = jnp.maximum(y1 + b1_ref[...], 0.0).astype(s1_ref.dtype)
        for k in range(Nb):
            s1_ref[k * B + 1:k * B + 1 + H, :] = y1[k * H:(k + 1) * H, :]

        # ---- conv3x3(pad=1) + ReLU: one banded matmul over ALL images
        # (K = 3*W*cin).  Garbage rows straddling image borders are discarded.
        l3 = jnp.concatenate(
            [s1_ref[0:R, :], s1_ref[1:R + 1, :], s1_ref[2:R + 2, :]], axis=-1)
        y2 = jnp.dot(l3, w3_ref[...], preferred_element_type=jnp.float32)
        y2 = jnp.maximum(y2 + b3_ref[...], 0.0).astype(s2_ref.dtype)
        for k in range(Nb):
            s2_ref[k * B + 1:k * B + 1 + H, :] = y2[k * B:k * B + H, :]

        # ---- ConvTranspose2d(k=4, s=2, p=1) --------------------------------
        bd = bd_ref[...]                      # hoisted bias broadcast source
        if merged:
            # v6e/v7x: one banded matmul with a 256-lane (a,j,b,co) output
            # fills the 256-wide MXU; both row parities come out interleaved.
            la = jnp.concatenate(
                [s2_ref[0:R, :], s2_ref[1:R + 1, :], s2_ref[2:R + 2, :]],
                axis=-1)
            od = jnp.dot(la, wd_ref[...], preferred_element_type=jnp.float32)
            od = od + bd                      # single broadcast-add
            for k in range(Nb):
                o_ref[k * H:(k + 1) * H, :] = od[k * B:k * B + H, :]
        else:
            # v5e (128-wide MXU): keep one 128-lane matmul per row parity.
            for a in range(2):
                la = jnp.concatenate(
                    [s2_ref[a:a + R, :], s2_ref[a + 1:a + 1 + R, :]], axis=-1)
                od = jnp.dot(la, wd_ref[a], preferred_element_type=jnp.float32)
                od = od + bd[:, a * 2 * wco:(a + 1) * 2 * wco]
                for k in range(Nb):
                    o_ref[k * H:(k + 1) * H,
                          a * 2 * wco:(a + 1) * 2 * wco] = od[k * B:k * B + H, :]

    return kernel


# --------------------------------------------------------------------------
# Host-side (numpy) weight re-layout: call ONCE per parameter update.
# --------------------------------------------------------------------------
def build_upblok_slabs(params, W, c_up, merged=True):
    """Re-layout PyTorch weights into lane-dense banded matmul slabs (numpy,
    host-side, once per parameter update -- NOT per forward call)."""
    w1, b1, w3, b3, wd, bd = [np.asarray(p, dtype=np.float32) for p in params]
    cin = w1.shape[1]                    # conv1x1.weight: (cin, cin, 1, 1)
    cout = w3.shape[0]                   # conv3x3.weight: (cout, cin, 3, 3)

    w1m = w1[:, :, 0, 0].T               # (ci, co)
    w3t = np.transpose(w3, (2, 3, 1, 0))  # (kh, kw, ci, co)
    wdm = np.transpose(wd, (2, 3, 0, 1))  # (kh, kw, ci, co), deconv ci=co=cout

    # conv1x1 -> block-diagonal, split into the up / shortcut row blocks so
    # the wrapper never materializes the channel concat.
    eyeW = np.eye(W, dtype=np.float32)
    w1u_slab = np.kron(eyeW, w1m[:c_up, :])   # (W*c_up, W*cin)
    w1s_slab = np.kron(eyeW, w1m[c_up:, :])   # (W*c_sc, W*cin)

    # conv3x3 -> banded (3*W*cin, W*cout): row (kh, j', ci), col (j, co),
    # nonzero iff j' = j + kw - 1 (missing j' == zero padding along W).
    eye_dx = np.stack(
        [np.eye(W, k=1 - dx, dtype=np.float32) for dx in range(3)])  # (kw,j',j)
    w3_slab = np.einsum('xab,yxio->yaibo', eye_dx, w3t).reshape(
        3 * W * cin, W * cout)

    # deconv: out[2i+a, 2j+b, co] = sum_{dy' in {0,1}, dx in {b,b+1}}
    #   y2pad[i+a+dy', j+dx-1] . Wd[kh=3-a-2*dy', kw=b+3-2*dx]
    if merged:
        # single slab (3*W*cout, 2*2*W*cout): row (t=a+dy', j', ci),
        # col (a, j, b, co) -- both parities interleaved on the lane axis.
        tm = np.zeros((3, W, cout, 2, W, 2, cout), np.float32)
        for a in range(2):
            for dyp in range(2):
                t = a + dyp
                kh = 3 - a - 2 * dyp
                for b in range(2):
                    for dx in (b, b + 1):
                        kw = b + 3 - 2 * dx
                        band = np.eye(W, k=1 - dx, dtype=np.float32)  # (j', j)
                        tm[t, :, :, a, :, b, :] += (
                            band[:, None, :, None]
                            * wdm[kh, kw][None, :, None, :])
        wd_slab = tm.reshape(3 * W * cout, 4 * W * cout)
    else:
        # two slabs (one per parity a), each (2*W*cout, 2*W*cout):
        # row (dy', j', ci), col (j, b, co).
        td = np.zeros((2, 2, W, cout, W, 2, cout), np.float32)
        for a in range(2):
            for dyp in range(2):
                kh = 3 - a - 2 * dyp
                for b in range(2):
                    for dx in (b, b + 1):
                        kw = b + 3 - 2 * dx
                        band = np.eye(W, k=1 - dx, dtype=np.float32)
                        td[a, dyp, :, :, :, b, :] += (
                            band[:, None, :, None]
                            * wdm[kh, kw][None, :, None, :])
        wd_slab = td.reshape(2, 2 * W * cout, 2 * W * cout)

    b1_row = np.tile(b1, W).reshape(1, W * cin)
    b3_row = np.tile(b3, W).reshape(1, W * cout)
    bd_row = np.tile(bd, 4 * W).reshape(1, 4 * W * cout)   # layout (a,j,b,co)

    cd = jnp.bfloat16
    return (jnp.asarray(w1u_slab, cd), jnp.asarray(w1s_slab, cd),
            jnp.asarray(b1_row, jnp.float32),
            jnp.asarray(w3_slab, cd), jnp.asarray(b3_row, jnp.float32),
            jnp.asarray(wd_slab, cd), jnp.asarray(bd_row, jnp.float32))


def use_merged_deconv():
    """v6e/v7x MXU output is 256 lanes wide -> one merged 256-lane deconv
    matmul fills it.  On v5e and older (128-wide) keep the two per-parity
    matmuls (the merged slab's structural zeros would cost real MXU passes)."""
    try:
        kind = jax.devices()[0].device_kind.lower()
    except Exception:
        return True
    return not any(tag in kind for tag in ("v2", "v3", "v4", "v5"))


def _pick_nb(N, H, target_rows=256):
    """Batch sub-tile Nb (divisor of N) so the matmul M dim Nb*H <= ~256
    (MXU height on v6e/v7x).  When the batch allows, prefer leaving >= 2 grid
    steps so v7x's two TensorCores both get work."""
    divisors = [d for d in range(1, N + 1) if N % d == 0 and d * H <= target_rows]
    if not divisors:
        return 1
    best = max(divisors)
    multi_step = [d for d in divisors if N // d >= 2 and d * H >= 64]
    if multi_step and N // best < 2:
        best = max(multi_step)
    return best


# --------------------------------------------------------------------------
# Forward wrapper
# --------------------------------------------------------------------------
def upblok_forward(upsampled, shortcut, slabs):
    """Pallas implementation of UpBlok.forward.  NCHW f32 in, NCHW f32 out.
    `slabs` = build_upblok_slabs(params, W, c_up, merged) (built once)."""
    w1u, w1s, b1r, w3s, b3r, wds, bdr = slabs
    N, c_up, H, W = upsampled.shape
    c_sc = shortcut.shape[1]
    cin = c_up + c_sc
    wci = W * cin
    cout = b3r.shape[1] // W
    wco = W * cout
    merged = (wds.ndim == 2)

    # NCHW -> NHWC -> (N*H, W*c) bf16.  The channel concat lives inside the
    # kernel (two conv1x1 row-block matmuls), so it never touches HBM.
    xu = jnp.transpose(upsampled, (0, 2, 3, 1)).reshape(
        N * H, W * c_up).astype(jnp.bfloat16)
    xs = jnp.transpose(shortcut, (0, 2, 3, 1)).reshape(
        N * H, W * c_sc).astype(jnp.bfloat16)

    Nb = _pick_nb(N, H)
    B = H + 2

    wd_spec = (pl.BlockSpec((3 * wco, 4 * wco), lambda n: (0, 0)) if merged
               else pl.BlockSpec((2, 2 * wco, 2 * wco), lambda n: (0, 0, 0)))

    out = pl.pallas_call(
        _make_kernel(Nb, H, merged, wco),
        out_shape=jax.ShapeDtypeStruct((N * H, 4 * wco), jnp.float32),
        grid_spec=pltpu.PrefetchScalarGridSpec(
            num_scalar_prefetch=0,
            grid=(N // Nb,),
            in_specs=[
                pl.BlockSpec((Nb * H, W * c_up), lambda n: (n, 0)),
                pl.BlockSpec((Nb * H, W * c_sc), lambda n: (n, 0)),
                pl.BlockSpec((W * c_up, wci), lambda n: (0, 0)),
                pl.BlockSpec((W * c_sc, wci), lambda n: (0, 0)),
                pl.BlockSpec((1, wci), lambda n: (0, 0)),
                pl.BlockSpec((3 * wci, wco), lambda n: (0, 0)),
                pl.BlockSpec((1, wco), lambda n: (0, 0)),
                wd_spec,
                pl.BlockSpec((1, 4 * wco), lambda n: (0, 0)),
            ],
            out_specs=pl.BlockSpec((Nb * H, 4 * wco), lambda n: (n, 0)),
            scratch_shapes=[
                pltpu.VMEM((Nb * B, wci), jnp.bfloat16),
                pltpu.VMEM((Nb * B, wco), jnp.bfloat16),
            ],
        ),
        compiler_params=pltpu.CompilerParams(
            dimension_semantics=("parallel",),
            vmem_limit_bytes=32 * 1024 * 1024),
    )(xu, xs, w1u, w1s, b1r, w3s, b3r, wds, bdr)

    # lanes (a, j, b, co): the sub-pixel interleave is free reshapes plus the
    # (required anyway) NHWC->NCHW transpose.
    out = out.reshape(N, H, 2, W, 2, cout)
    out = out.transpose(0, 5, 1, 2, 3, 4).reshape(N, cout, 2 * H, 2 * W)
    return out


# --------------------------------------------------------------------------
# Pure-JAX reference (PyTorch semantics, same bf16-operand / f32-accum numerics)
# --------------------------------------------------------------------------
def upblok_reference(upsampled, shortcut, params):
    w1, b1, w3, b3, wd, bd = params
    x = jnp.concatenate([upsampled, shortcut], axis=1)
    x = jnp.transpose(x, (0, 2, 3, 1)).astype(jnp.bfloat16)            # NHWC
    # conv1x1 + relu
    w1h = jnp.transpose(w1[:, :, 0, 0], (1, 0)).astype(jnp.bfloat16)
    y = jnp.einsum('nhwc,co->nhwo', x, w1h,
                   preferred_element_type=jnp.float32) + b1
    y = jax.nn.relu(y).astype(jnp.bfloat16)
    # conv3x3, stride 1, pad 1 + relu
    y = jax.lax.conv_general_dilated(
        y, jnp.transpose(w3, (2, 3, 1, 0)).astype(jnp.bfloat16), (1, 1), 'SAME',
        dimension_numbers=('NHWC', 'HWIO', 'NHWC'),
        preferred_element_type=jnp.float32) + b3
    y = jax.nn.relu(y).astype(jnp.bfloat16)
    # ConvTranspose2d(k=4, s=2, p=1) == lhs-dilated conv with flipped kernel
    wdf = jnp.transpose(wd, (2, 3, 0, 1))[::-1, ::-1, :, :].astype(jnp.bfloat16)
    y = jax.lax.conv_general_dilated(
        y, wdf, (1, 1), ((2, 2), (2, 2)), lhs_dilation=(2, 2),
        dimension_numbers=('NHWC', 'HWIO', 'NHWC'),
        preferred_element_type=jnp.float32) + bd
    return jnp.transpose(y, (0, 3, 1, 2))


if __name__ == "__main__":
    key = jax.random.PRNGKey(0)
    ks = jax.random.split(key, 8)
    N, c_up, c_sc, H, W = 2, 4, 4, 8, 8
    cin = c_up + c_sc           # in_channels of UpBlok
    cout = 8                    # out_channels of UpBlok

    upsampled = jax.random.normal(ks[0], (N, c_up, H, W), jnp.float32)
    shortcut = jax.random.normal(ks[1], (N, c_sc, H, W), jnp.float32)

    # Deterministic synthetic parameters, PyTorch layouts.
    params = (
        0.2 * jax.random.normal(ks[2], (cin, cin, 1, 1), jnp.float32),    # conv1x1.weight
        0.1 * jax.random.normal(ks[3], (cin,), jnp.float32),              # conv1x1.bias
        0.2 * jax.random.normal(ks[4], (cout, cin, 3, 3), jnp.float32),   # conv3x3.weight
        0.1 * jax.random.normal(ks[5], (cout,), jnp.float32),             # conv3x3.bias
        0.2 * jax.random.normal(ks[6], (cout, cout, 4, 4), jnp.float32),  # deconv.weight
        0.1 * jax.random.normal(ks[7], (cout,), jnp.float32),             # deconv.bias
    )

    # Banded slabs are built ONCE (host/numpy), outside the jitted forward.
    merged = use_merged_deconv()
    slabs = build_upblok_slabs(params, W=W, c_up=c_up, merged=merged)

    out = jax.block_until_ready(
        jax.jit(upblok_forward)(upsampled, shortcut, slabs))
    ref = jax.block_until_ready(upblok_reference(upsampled, shortcut, params))

    assert out.shape == (N, cout, 2 * H, 2 * W), out.shape
    np.testing.assert_allclose(np.asarray(out), np.asarray(ref),
                               rtol=1e-2, atol=1e-2)
    print("KERNEL_OK")
</pallas_src>

<mosaic_0001>
module attributes {stable_mosaic.version = 11 : i64} {
  func.func @kernel(%arg0: i32, %arg1: memref<16x32xbf16, #tpu.memory_space<vmem>>, %arg2: memref<16x32xbf16, #tpu.memory_space<vmem>>, %arg3: memref<32x64xbf16, #tpu.memory_space<vmem>>, %arg4: memref<32x64xbf16, #tpu.memory_space<vmem>>, %arg5: memref<1x64xf32, #tpu.memory_space<vmem>>, %arg6: memref<192x64xbf16, #tpu.memory_space<vmem>>, %arg7: memref<1x64xf32, #tpu.memory_space<vmem>>, %arg8: memref<192x256xbf16, #tpu.memory_space<vmem>>, %arg9: memref<1x256xf32, #tpu.memory_space<vmem>>, %arg10: memref<16x256xf32, #tpu.memory_space<vmem>>, %arg11: memref<20x64xbf16, #tpu.memory_space<vmem>>, %arg12: memref<20x64xbf16, #tpu.memory_space<vmem>>) attributes {dimension_semantics = [#tpu.dimension_semantics<parallel>], iteration_bounds = array<i64: 1>, scalar_prefetch = 0 : i64, scratch_operands = 2 : i64, tpu.core_type = #tpu.core_type<tc>, window_params = [{transform_indices = @transform_0, window_bounds = array<i64: 16, 32>}, {transform_indices = @transform_1, window_bounds = array<i64: 16, 32>}, {pipeline_mode = #tpu.pipeline_mode<synchronous>, transform_indices = @transform_2, window_bounds = array<i64: 32, 64>}, {pipeline_mode = #tpu.pipeline_mode<synchronous>, transform_indices = @transform_3, window_bounds = array<i64: 32, 64>}, {pipeline_mode = #tpu.pipeline_mode<synchronous>, transform_indices = @transform_4, window_bounds = array<i64: 1, 64>}, {pipeline_mode = #tpu.pipeline_mode<synchronous>, transform_indices = @transform_5, window_bounds = array<i64: 192, 64>}, {pipeline_mode = #tpu.pipeline_mode<synchronous>, transform_indices = @transform_6, window_bounds = array<i64: 1, 64>}, {pipeline_mode = #tpu.pipeline_mode<synchronous>, transform_indices = @transform_7, window_bounds = array<i64: 192, 256>}, {pipeline_mode = #tpu.pipeline_mode<synchronous>, transform_indices = @transform_8, window_bounds = array<i64: 1, 256>}, {transform_indices = @transform_9, window_bounds = array<i64: 16, 256>}]} {
    %cst = arith.constant 0.000000e+00 : bf16
    %0 = vector.broadcast %cst : bf16 to vector<20x64xbf16>
    %c0 = arith.constant 0 : index
    %c0_0 = arith.constant 0 : index
    %1 = vector.load %arg11[%c0, %c0_0] : memref<20x64xbf16, #tpu.memory_space<vmem>>, vector<20x64xbf16>
    tpu.vector_store %arg11[%c0, %c0_0], %0 {strides = array<i32>} : memref<20x64xbf16, #tpu.memory_space<vmem>>, vector<20x64xbf16>,
    %cst_1 = arith.constant 0.000000e+00 : bf16
    %2 = vector.broadcast %cst_1 : bf16 to vector<20x64xbf16>
    %c0_2 = arith.constant 0 : index
    %c0_3 = arith.constant 0 : index
    %3 = vector.load %arg12[%c0_2, %c0_3] : memref<20x64xbf16, #tpu.memory_space<vmem>>, vector<20x64xbf16>
    tpu.vector_store %arg12[%c0_2, %c0_3], %2 {strides = array<i32>} : memref<20x64xbf16, #tpu.memory_space<vmem>>, vector<20x64xbf16>,
    %c0_4 = arith.constant 0 : index
    %c0_5 = arith.constant 0 : index
    %4 = vector.load %arg1[%c0_4, %c0_5] : memref<16x32xbf16, #tpu.memory_space<vmem>>, vector<16x32xbf16>
    %c0_6 = arith.constant 0 : index
    %c0_7 = arith.constant 0 : index
    %5 = vector.load %arg3[%c0_6, %c0_7] : memref<32x64xbf16, #tpu.memory_space<vmem>>, vector<32x64xbf16>
    %cst_8 = arith.constant dense<0.000000e+00> : vector<16x64xf32>
    %6 = tpu.matmul %4, %5, %cst_8 {dimension_numbers = #tpu.dot_dimension_numbers<[1], [0], [0], [1], [0, 0, 1, 1], [], []>} : vector<16x32xbf16>, vector<32x64xbf16>, vector<16x64xf32> -> vector<16x64xf32>
    %c0_9 = arith.constant 0 : index
    %c0_10 = arith.constant 0 : index
    %7 = vector.load %arg2[%c0_9, %c0_10] : memref<16x32xbf16, #tpu.memory_space<vmem>>, vector<16x32xbf16>
    %c0_11 = arith.constant 0 : index
    %c0_12 = arith.constant 0 : index
    %8 = vector.load %arg4[%c0_11, %c0_12] : memref<32x64xbf16, #tpu.memory_space<vmem>>, vector<32x64xbf16>
    %cst_13 = arith.constant dense<0.000000e+00> : vector<16x64xf32>
    %9 = tpu.matmul %7, %8, %cst_13 {dimension_numbers = #tpu.dot_dimension_numbers<[1], [0], [0], [1], [0, 0, 1, 1], [], []>} : vector<16x32xbf16>, vector<32x64xbf16>, vector<16x64xf32> -> vector<16x64xf32>
    %10 = arith.addf %6, %9 : vector<16x64xf32>
    %c0_14 = arith.constant 0 : index
    %c0_15 = arith.constant 0 : index
    %11 = vector.load %arg5[%c0_14, %c0_15] : memref<1x64xf32, #tpu.memory_space<vmem>>, vector<1x64xf32>
    %12 = vector.broadcast %11 : vector<1x64xf32> to vector<16x64xf32>
    %13 = arith.addf %10, %12 : vector<16x64xf32>
    %cst_16 = arith.constant 0.000000e+00 : f32
    %14 = vector.broadcast %cst_16 : f32 to vector<16x64xf32>
    %15 = arith.maximumf %13, %14 : vector<16x64xf32>
    %16 = arith.truncf %15 : vector<16x64xf32> to vector<16x64xbf16>
    %17 = vector.extract_strided_slice %16 {offsets = [0, 0], sizes = [8, 64], strides = [1, 1]} : vector<16x64xbf16> to vector<8x64xbf16>
    %c1 = arith.constant 1 : index
    %c0_17 = arith.constant 0 : index
    %18 = vector.load %arg11[%c1, %c0_17] : memref<20x64xbf16, #tpu.memory_space<vmem>>, vector<8x64xbf16>
    tpu.vector_store %arg11[%c1, %c0_17], %17 {strides = array<i32>} : memref<20x64xbf16, #tpu.memory_space<vmem>>, vector<8x64xbf16>,
    %19 = vector.extract_strided_slice %16 {offsets = [8, 0], sizes = [8, 64], strides = [1, 1]} : vector<16x64xbf16> to vector<8x64xbf16>
    %c11 = arith.constant 11 : index
    %c0_18 = arith.constant 0 : index
    %20 = vector.load %arg11[%c11, %c0_18] : memref<20x64xbf16, #tpu.memory_space<vmem>>, vector<8x64xbf16>
    tpu.vector_store %arg11[%c11, %c0_18], %19 {strides = array<i32>} : memref<20x64xbf16, #tpu.memory_space<vmem>>, vector<8x64xbf16>,
    %c0_19 = arith.constant 0 : index
    %c0_20 = arith.constant 0 : index
    %21 = vector.load %arg11[%c0_19, %c0_20] : memref<20x64xbf16, #tpu.memory_space<vmem>>, vector<18x64xbf16>
    %c1_21 = arith.constant 1 : index
    %c0_22 = arith.constant 0 : index
    %22 = vector.load %arg11[%c1_21, %c0_22] : memref<20x64xbf16, #tpu.memory_space<vmem>>, vector<18x64xbf16>
    %c2 = arith.constant 2 : index
    %c0_23 = arith.constant 0 : index
    %23 = vector.load %arg11[%c2, %c0_23] : memref<20x64xbf16, #tpu.memory_space<vmem>>, vector<18x64xbf16>
    %24 = tpu.concatenate %21, %22, %23 in 1 : vector<18x64xbf16>, vector<18x64xbf16>, vector<18x64xbf16> -> vector<18x192xbf16>
    %c0_24 = arith.constant 0 : index
    %c0_25 = arith.constant 0 : index
    %25 = vector.load %arg6[%c0_24, %c0_25] : memref<192x64xbf16, #tpu.memory_space<vmem>>, vector<192x64xbf16>
    %cst_26 = arith.constant dense<0.000000e+00> : vector<18x64xf32>
    %26 = tpu.matmul %24, %25, %cst_26 {dimension_numbers = #tpu.dot_dimension_numbers<[1], [0], [0], [1], [0, 0, 1, 1], [], []>} : vector<18x192xbf16>, vector<192x64xbf16>, vector<18x64xf32> -> vector<18x64xf32>
    %c0_27 = arith.constant 0 : index
    %c0_28 = arith.constant 0 : index
    %27 = vector.load %arg7[%c0_27, %c0_28] : memref<1x64xf32, #tpu.memory_space<vmem>>, vector<1x64xf32>
    %28 = vector.broadcast %27 : vector<1x64xf32> to vector<18x64xf32>
    %29 = arith.addf %26, %28 : vector<18x64xf32>
    %cst_29 = arith.constant 0.000000e+00 : f32
    %30 = vector.broadcast %cst_29 : f32 to vector<18x64xf32>
    %31 = arith.maximumf %29, %30 : vector<18x64xf32>
    %32 = arith.truncf %31 : vector<18x64xf32> to vector<18x64xbf16>
    %33 = vector.extract_strided_slice %32 {offsets = [0, 0], sizes = [8, 64], strides = [1, 1]} : vector<18x64xbf16> to vector<8x64xbf16>
    %c1_30 = arith.constant 1 : index
    %c0_31 = arith.constant 0 : index
    %34 = vector.load %arg12[%c1_30, %c0_31] : memref<20x64xbf16, #tpu.memory_space<vmem>>, vector<8x64xbf16>
    tpu.vector_store %arg12[%c1_30, %c0_31], %33 {strides = array<i32>} : memref<20x64xbf16, #tpu.memory_space<vmem>>, vector<8x64xbf16>,
    %35 = vector.extract_strided_slice %32 {offsets = [10, 0], sizes = [8, 64], strides = [1, 1]} : vector<18x64xbf16> to vector<8x64xbf16>
    %c11_32 = arith.constant 11 : index
    %c0_33 = arith.constant 0 : index
    %36 = vector.load %arg12[%c11_32, %c0_33] : memref<20x64xbf16, #tpu.memory_space<vmem>>, vector<8x64xbf16>
    tpu.vector_store %arg12[%c11_32, %c0_33], %35 {strides = array<i32>} : memref<20x64xbf16, #tpu.memory_space<vmem>>, vector<8x64xbf16>,
    %c0_34 = arith.constant 0 : index
    %c0_35 = arith.constant 0 : index
    %37 = vector.load %arg9[%c0_34, %c0_35] : memref<1x256xf32, #tpu.memory_space<vmem>>, vector<1x256xf32>
    %c0_36 = arith.constant 0 : index
    %c0_37 = arith.constant 0 : index
    %38 = vector.load %arg12[%c0_36, %c0_37] : memref<20x64xbf16, #tpu.memory_space<vmem>>, vector<18x64xbf16>
    %c1_38 = arith.constant 1 : index
    %c0_39 = arith.constant 0 : index
    %39 = vector.load %arg12[%c1_38, %c0_39] : memref<20x64xbf16, #tpu.memory_space<vmem>>, vector<18x64xbf16>
    %c2_40 = arith.constant 2 : index
    %c0_41 = arith.constant 0 : index
    %40 = vector.load %arg12[%c2_40, %c0_41] : memref<20x64xbf16, #tpu.memory_space<vmem>>, vector<18x64xbf16>
    %41 = tpu.concatenate %38, %39, %40 in 1 : vector<18x64xbf16>, vector<18x64xbf16>, vector<18x64xbf16> -> vector<18x192xbf16>
    %c0_42 = arith.constant 0 : index
    %c0_43 = arith.constant 0 : index
    %42 = vector.load %arg8[%c0_42, %c0_43] : memref<192x256xbf16, #tpu.memory_space<vmem>>, vector<192x256xbf16>
    %cst_44 = arith.constant dense<0.000000e+00> : vector<18x256xf32>
    %43 = tpu.matmul %41, %42, %cst_44 {dimension_numbers = #tpu.dot_dimension_numbers<[1], [0], [0], [1], [0, 0, 1, 1], [], []>} : vector<18x192xbf16>, vector<192x256xbf16>, vector<18x256xf32> -> vector<18x256xf32>
    %44 = vector.broadcast %37 : vector<1x256xf32> to vector<18x256xf32>
    %45 = arith.addf %43, %44 : vector<18x256xf32>
    %46 = vector.extract_strided_slice %45 {offsets = [0, 0], sizes = [8, 256], strides = [1, 1]} : vector<18x256xf32> to vector<8x256xf32>
    %c0_45 = arith.constant 0 : index
    %c0_46 = arith.constant 0 : index
    %47 = vector.load %arg10[%c0_45, %c0_46] : memref<16x256xf32, #tpu.memory_space<vmem>>, vector<8x256xf32>
    tpu.vector_store %arg10[%c0_45, %c0_46], %46 {strides = array<i32>} : memref<16x256xf32, #tpu.memory_space<vmem>>, vector<8x256xf32>,
    %48 = vector.extract_strided_slice %45 {offsets = [10, 0], sizes = [8, 256], strides = [1, 1]} : vector<18x256xf32> to vector<8x256xf32>
    %c8 = arith.constant 8 : index
    %c0_47 = arith.constant 0 : index
    %49 = vector.load %arg10[%c8, %c0_47] : memref<16x256xf32, #tpu.memory_space<vmem>>, vector<8x256xf32>
    tpu.vector_store %arg10[%c8, %c0_47], %48 {strides = array<i32>} : memref<16x256xf32, #tpu.memory_space<vmem>>, vector<8x256xf32>,
    return
  }
  func.func @transform_0(%arg0: i32) -> (i32, i32) {
    %c0_i32 = arith.constant 0 : i32
    %c0_i32_0 = arith.constant 0 : i32
    return %arg0, %c0_i32 : i32, i32
  }
  func.func @transform_1(%arg0: i32) -> (i32, i32) {
    %c0_i32 = arith.constant 0 : i32
    %c0_i32_0 = arith.constant 0 : i32
    return %arg0, %c0_i32 : i32, i32
  }
  func.func @transform_2(%arg0: i32) -> (i32, i32) {
    %c0_i32 = arith.constant 0 : i32
    %c0_i32_0 = arith.constant 0 : i32
    %c0_i32_1 = arith.constant 0 : i32
    return %c0_i32, %c0_i32_0 : i32, i32
  }
  func.func @transform_3(%arg0: i32) -> (i32, i32) {
    %c0_i32 = arith.constant 0 : i32
    %c0_i32_0 = arith.constant 0 : i32
    %c0_i32_1 = arith.constant 0 : i32
    return %c0_i32, %c0_i32_0 : i32, i32
  }
  func.func @transform_4(%arg0: i32) -> (i32, i32) {
    %c0_i32 = arith.constant 0 : i32
    %c0_i32_0 = arith.constant 0 : i32
    %c0_i32_1 = arith.constant 0 : i32
    return %c0_i32, %c0_i32_0 : i32, i32
  }
  func.func @transform_5(%arg0: i32) -> (i32, i32) {
    %c0_i32 = arith.constant 0 : i32
    %c0_i32_0 = arith.constant 0 : i32
    %c0_i32_1 = arith.constant 0 : i32
    return %c0_i32, %c0_i32_0 : i32, i32
  }
  func.func @transform_6(%arg0: i32) -> (i32, i32) {
    %c0_i32 = arith.constant 0 : i32
    %c0_i32_0 = arith.constant 0 : i32
    %c0_i32_1 = arith.constant 0 : i32
    return %c0_i32, %c0_i32_0 : i32, i32
  }
  func.func @transform_7(%arg0: i32) -> (i32, i32) {
    %c0_i32 = arith.constant 0 : i32
    %c0_i32_0 = arith.constant 0 : i32
    %c0_i32_1 = arith.constant 0 : i32
    return %c0_i32, %c0_i32_0 : i32, i32
  }
  func.func @transform_8(%arg0: i32) -> (i32, i32) {
    %c0_i32 = arith.constant 0 : i32
    %c0_i32_0 = arith.constant 0 : i32
    %c0_i32_1 = arith.constant 0 : i32
    return %c0_i32, %c0_i32_0 : i32, i32
  }
  func.func @transform_9(%arg0: i32) -> (i32, i32) {
    %c0_i32 = arith.constant 0 : i32
    %c0_i32_0 = arith.constant 0 : i32
    return %arg0, %c0_i32 : i32, i32
  }
}

</mosaic_0001>

<llo_original>
// kernel: upblok_forward.1
$region0: #{upblok_forward.1}
  #allocation0 [shape = 'u32[]', space=smem, size = 0x4, offset = 0x4, fixed_abs, tag = 'smem constant byte address 0x4 - core index']
  #allocation1 [shape = 'u32[72,128]{1,0:T(1,128)}', space=vmem, size = 0x9000, scoped, tag = 'internal scratch']
  #allocation2 [shape = 'bf16[20,64]{1,0:T(8,128)(2,1)}', space=vmem, size = 0x1800, scoped, tag = 'scratch operand']
  #allocation3 [shape = 'bf16[20,64]{1,0:T(8,128)(2,1)}', space=vmem, size = 0x1800, scoped, tag = 'scratch operand']
  %s0 = inlined_call_operand.vmem [shape: bf16[16,32], index: 0, kind: input, shape index: {}]
  %s1 = inlined_call_operand.vmem [shape: bf16[16,32], index: 1, kind: input, shape index: {}]
  %s2 = inlined_call_operand.vmem [shape: bf16[32,64], index: 2, kind: input, shape index: {}]
  %s3 = inlined_call_operand.vmem [shape: bf16[32,64], index: 3, kind: input, shape index: {}]
  %s4 = inlined_call_operand.vmem [shape: f32[1,64], index: 4, kind: input, shape index: {}]
  %s5 = inlined_call_operand.vmem [shape: bf16[192,64], index: 5, kind: input, shape index: {}]
  %s6 = inlined_call_operand.vmem [shape: f32[1,64], index: 6, kind: input, shape index: {}]
  %s7 = inlined_call_operand.vmem [shape: bf16[192,256], index: 7, kind: input, shape index: {}]
  %s8 = inlined_call_operand.vmem [shape: f32[1,256], index: 8, kind: input, shape index: {}]
  %s9 = inlined_call_operand.vmem [shape: f32[16,256], index: 9, kind: output, shape index: {}]
  %s10 = sld [smem:[#allocation0]]
  $region46: #{upblok_forward.1} parent=0
    _
  %s12 = ssub.s32 1, %s10
  %s13 = scalar_select 0, %s12, %s10
  // Predicated region
  $region2: #{upblok_forward.1} parent=0 // pred_check
    _
  $region3: #{upblok_forward.1} parent=0 // pred_check_branch
    %15 = sbr.rel (0) target = $region5
  $region4: #{upblok_forward.1} parent=0 // pred_region
    _
  $region5: #{upblok_forward.1} parent=0 // pred_fallthru
    _
  // Predicated region
  $region6: #{upblok_forward.1} parent=0 // pred_check
    _
  $region7: #{upblok_forward.1} parent=0 // pred_check_branch
    %17 = sbr.rel (0) target = $region9
  $region8: #{upblok_forward.1} parent=0 // pred_region
    _
  $region9: #{upblok_forward.1} parent=0 // pred_fallthru
    _
  // Predicated region
  $region10: #{upblok_forward.1} parent=0 // pred_check
    _
  $region11: #{upblok_forward.1} parent=0 // pred_check_branch
    %19 = sbr.rel (0) target = $region13
  $region12: #{upblok_forward.1} parent=0 // pred_region
    _
  $region13: #{upblok_forward.1} parent=0 // pred_fallthru
    _
  // Predicated region
  $region14: #{upblok_forward.1} parent=0 // pred_check
    _
  $region15: #{upblok_forward.1} parent=0 // pred_check_branch
    %21 = sbr.rel (0) target = $region17
  $region16: #{upblok_forward.1} parent=0 // pred_region
    _
  $region17: #{upblok_forward.1} parent=0 // pred_fallthru
    _
  // Predicated region
  $region18: #{upblok_forward.1} parent=0 // pred_check
    _
  $region19: #{upblok_forward.1} parent=0 // pred_check_branch
    %23 = sbr.rel (0) target = $region21
  $region20: #{upblok_forward.1} parent=0 // pred_region
    _
  $region21: #{upblok_forward.1} parent=0 // pred_fallthru
    _
  // Predicated region
  $region22: #{upblok_forward.1} parent=0 // pred_check
    _
  $region23: #{upblok_forward.1} parent=0 // pred_check_branch
    %25 = sbr.rel (0) target = $region25
  $region24: #{upblok_forward.1} parent=0 // pred_region
    _
  $region25: #{upblok_forward.1} parent=0 // pred_fallthru
    _
  // Predicated region
  $region26: #{upblok_forward.1} parent=0 // pred_check
    _
  $region27: #{upblok_forward.1} parent=0 // pred_check_branch
    %27 = sbr.rel (0) target = $region29
  $region28: #{upblok_forward.1} parent=0 // pred_region
    _
  $region29: #{upblok_forward.1} parent=0 // pred_fallthru
    _
  // Predicated region
  $region30: #{upblok_forward.1} parent=0 // pred_check
    _
  $region31: #{upblok_forward.1} parent=0 // pred_check_branch
    %29 = sbr.rel (0) target = $region33
  $region32: #{upblok_forward.1} parent=0 // pred_region
    _
  $region33: #{upblok_forward.1} parent=0 // pred_fallthru
    _
  // Predicated region
  $region34: #{upblok_forward.1} parent=0 // pred_check
    _
  $region35: #{upblok_forward.1} parent=0 // pred_check_branch
    %31 = sbr.rel (0) target = $region37
  $region36: #{upblok_forward.1} parent=0 // pred_region
    _
  $region37: #{upblok_forward.1} parent=0 // pred_fallthru
    _
  %vm33 = vcmask 519168
  %34 = vst.msk [vmem:[#allocation2] sm:$0xf] %vm33, 0
  %35 = vst.msk [vmem:[#allocation2 + $0x4] sm:$0xf] %vm33, 0
  %vm36 = vcmask 517120
  %37 = vst.msk [vmem:[#allocation2 + $0x8] sm:$0x3] %vm36, 0
  %38 = vst.msk [vmem:[#allocation3] sm:$0xf] %vm33, 0
  %39 = vst.msk [vmem:[#allocation3 + $0x4] sm:$0xf] %vm33, 0
  %40 = vst.msk [vmem:[#allocation3 + $0x8] sm:$0x3] %vm36, 0
  %v41 = vld [vmem:[%s0] sm:$0xf]
  %v42 = vld [vmem:[%s0 + $0x4] sm:$0xf]
  %v43 = vld [vmem:[%s2] sm:$0xf]
  %v44 = vld [vmem:[%s2 + $0x4] sm:$0xf]
  %v45 = vld [vmem:[%s2 + $0x8] sm:$0xf]
  %v46 = vld [vmem:[%s2 + $0xc] sm:$0xf]
  %v47 = vld [vmem:[%s1] sm:$0xf]
  %v48 = vld [vmem:[%s1 + $0x4] sm:$0xf]
  %v49 = vld [vmem:[%s3] sm:$0xf]
  %v50 = vld [vmem:[%s3 + $0x4] sm:$0xf]
  %v51 = vld [vmem:[%s3 + $0x8] sm:$0xf]
  %v52 = vld [vmem:[%s3 + $0xc] sm:$0xf]
  %v55 = vunpack.c.l.b16 %v47
  %v56 = vunpack.c.l.b16 %v48
  %v57 = vpack.c.b16 %v56, %v55
  %v62 = vunpack.c.l.b16 %v49
  %v63 = vunpack.c.l.b16 %v50
  %v64 = vunpack.c.l.b16 %v51
  %v65 = vunpack.c.l.b16 %v52
  %v66 = vpack.c.b16 %v63, %v62
  %v67 = vpack.c.b16 %v65, %v64
  %vm70 = vcmask 261120
  %v72 = vsel %vm70, %v57, 0
  %74 = vmatpush.bf16.msra.mxu0 0
  %75 = vmatpush.bf16.msra.mxu0 0
  %76 = vmatpush.bf16.msra.mxu0 0
  %77 = vmatpush.bf16.msra.mxu0 0
  %78 = vmatpush.bf16.msra.mxu0 0
  %79 = vmatpush.bf16.msra.mxu0 0
  %80 = vmatpush.bf16.msra.mxu0 %v67
  %81 = vmatpush.bf16.msra.mxu0 %v66
  %82 = vmatmul.bf16.gmra.mxu0 %v72
  %v83 = vpop.f32.mrf.mxu0
  %v84 = vadd.f32 0.0, %v83
  %v85 = vpop.f32.mrf.mxu0
  %v86 = vadd.f32 0.0, %v85
  %87 = vdwg.mxu0
  %v90 = vunpack.c.l.b16 %v41
  %v91 = vunpack.c.l.b16 %v42
  %v92 = vpack.c.b16 %v91, %v90
  %v97 = vunpack.c.l.b16 %v43
  %v98 = vunpack.c.l.b16 %v44
  %v99 = vunpack.c.l.b16 %v45
  %v100 = vunpack.c.l.b16 %v46
  %v101 = vpack.c.b16 %v98, %v97
  %v102 = vpack.c.b16 %v100, %v99
  %v106 = vsel %vm70, %v92, 0
  %108 = vmatpush.bf16.msra.mxu0 0
  %109 = vmatpush.bf16.msra.mxu0 0
  %110 = vmatpush.bf16.msra.mxu0 0
  %111 = vmatpush.bf16.msra.mxu0 0
  %112 = vmatpush.bf16.msra.mxu0 0
  %113 = vmatpush.bf16.msra.mxu0 0
  %114 = vmatpush.bf16.msra.mxu0 %v102
  %115 = vmatpush.bf16.msra.mxu0 %v101
  %116 = vmatmul.bf16.gmra.mxu0 %v106
  %v117 = vpop.f32.mrf.mxu0
  %v118 = vadd.f32 %v84, %v117
  %v119 = vpop.f32.mrf.mxu0
  %v120 = vadd.f32 %v86, %v119
  %121 = vdwg.mxu0
  %v122 = vld [vmem:[%s4] sm:$0x1]
  %v124 = vperm.slane %v122, 0
  %v126 = vadd.f32 %v118, %v124
  %v127 = vadd.f32 %v120, %v124
  %v128 = vmax.f32 %v126, 0.0
  %v129 = vmax.f32 %v127, 0.0
  %v130 = vpack.c.bf16 %v128, %v128
  %v131 = vpack.c.bf16 %v129, %v129
  %v133 = vshrl.u32 %v130, 16
  %v135 = vrot.slane %v133, 7
  %v136 = vshll.u32 %v130, 16
  %v138 = vor.u32 %v135, %v136
  %v139 = vrot.slane %v135, 4
  %vm142 = vcmask 519168
  %vm143 = vsmask.f32 7938
  %vm144 = vmand %vm142, %vm143
  %v145 = vld [vmem:[#allocation2] sm:$0xf]
  %v146 = vsel %vm144, %v138, %v145
  %147 = vst [vmem:[#allocation2] sm:$0xf] %v146
  %vm148 = vcmask 516096
  %vm149 = vsmask.f32 256
  %vm150 = vmand %vm148, %vm149
  %v151 = vld [vmem:[#allocation2 + $0x4] sm:$0x1]
  %v152 = vsel %vm150, %v139, %v151
  %153 = vst [vmem:[#allocation2 + $0x4] sm:$0x1] %v152
  %v155 = vshrl.u32 %v131, 16
  %v157 = vrot.slane %v155, 6
  %v158 = vshll.u32 %v131, 16
  %v160 = vrot.slane %v158, 7
  %v161 = vor.u32 %v157, %v160
  %v162 = vrot.slane %v161, 4
  %vm165 = vcmask 519169
  %vm166 = vsmask.f32 7942
  %vm167 = vmand %vm165, %vm166
  %v168 = vld [vmem:[#allocation2 + $0x4] sm:$0xe]
  %v169 = vsel %vm167, %v161, %v168
  %170 = vst [vmem:[#allocation2 + $0x4] sm:$0xe] %v169
  %vm171 = vcmask 517120
  %vm172 = vsmask.f32 1280
  %vm173 = vmand %vm171, %vm172
  %v174 = vld [vmem:[#allocation2 + $0x8] sm:$0x3]
  %v175 = vsel %vm173, %v162, %v174
  %176 = vst [vmem:[#allocation2 + $0x8] sm:$0x3] %v175
  %v177 = vld [vmem:[#allocation2] sm:$0xf]
  %v178 = vld [vmem:[#allocation2 + $0x4] sm:$0xf]
  %v179 = vld [vmem:[#allocation2 + $0x8] sm:$0x1]
  %v180 = vld [vmem:[#allocation2 + $0x8] sm:$0x3]
  %v181 = vld [vmem:[#allocation2] sm:$0xe]
  %v185 = vunpack.c.l.b16 %v177
  %v186 = vunpack.c.l.b16 %v178
  %v187 = vunpack.c.l.b16 %v179
  %v188 = vpack.c.b16 %v186, %v185
  %v189 = vpack.c.b16 %v187, %v187
  %v191 = vunpack.c.l.b16 %v180
  %v192 = vpack.c.b16 %v191, %v191
  %vm193 = vsmask.f32 7424
  %v195 = vshrl.u32 %v188, 16
  %v197 = vshll.u32 %v188, 16
  %v199 = vrot.slane %v197, 1
  %v200 = vor.u32 %v195, %v199
  %v202 = vshll.u32 %v192, 16
  %v204 = vrot.slane %v202, 1
  %v205 = vsel %vm193, %v200, %v204
  %v206 = vshrl.u32 %v192, 16
  %v208 = vor.u32 %v206, %v204
  %209 = vrot.lane.b32.xlu0 %v205, 64
  %v210 = vpop.permute.xlu0 %209
  %211 = vrot.lane.b32.xlu0 %v208, 64
  %v212 = vpop.permute.xlu0 %211
  %v214 = vunpack.c.l.b16 %v181
  %v215 = vpack.c.b16 %v186, %v214
  %vm216 = vcmask 1046528
  %v217 = vrot.slane %v215, 1
  %v218 = vrot.slane %v192, 1
  %v219 = vsel %vm216, %v217, %v218
  %vm220 = vcmask 523264
  %v222 = vsel %vm220, %v188, %v210
  %v226 = vsel %vm220, %v189, %v212
  %v228 = vld [vmem:[%s5] sm:$0xf]
  %v229 = vld [vmem:[%s5 + $0x4] sm:$0xf]
  %v230 = vld [vmem:[%s5 + $0x8] sm:$0xf]
  %v231 = vld [vmem:[%s5 + $0xc] sm:$0xf]
  %v232 = vld [vmem:[%s5 + $0x10] sm:$0xf]
  %v233 = vld [vmem:[%s5 + $0x14] sm:$0xf]
  %v234 = vld [vmem:[%s5 + $0x18] sm:$0xf]
  %v235 = vld [vmem:[%s5 + $0x1c] sm:$0xf]
  %v236 = vld [vmem:[%s5 + $0x20] sm:$0xf]
  %v237 = vld [vmem:[%s5 + $0x24] sm:$0xf]
  %v238 = vld [vmem:[%s5 + $0x28] sm:$0xf]
  %v239 = vld [vmem:[%s5 + $0x2c] sm:$0xf]
  %v240 = vld [vmem:[%s5 + $0x30] sm:$0xf]
  %v241 = vld [vmem:[%s5 + $0x34] sm:$0xf]
  %v242 = vld [vmem:[%s5 + $0x38] sm:$0xf]
  %v243 = vld [vmem:[%s5 + $0x3c] sm:$0xf]
  %v244 = vld [vmem:[%s5 + $0x40] sm:$0xf]
  %v245 = vld [vmem:[%s5 + $0x44] sm:$0xf]
  %v246 = vld [vmem:[%s5 + $0x48] sm:$0xf]
  %v247 = vld [vmem:[%s5 + $0x4c] sm:$0xf]
  %v248 = vld [vmem:[%s5 + $0x50] sm:$0xf]
  %v249 = vld [vmem:[%s5 + $0x54] sm:$0xf]
  %v250 = vld [vmem:[%s5 + $0x58] sm:$0xf]
  %v251 = vld [vmem:[%s5 + $0x5c] sm:$0xf]
  %v252 = vld [vmem:[%s6] sm:$0x1]
  %v254 = vperm.slane %v252, 0
  %v280 = vunpack.c.l.b16 %v228
  %v281 = vunpack.c.l.b16 %v229
  %v282 = vunpack.c.l.b16 %v230
  %v283 = vunpack.c.l.b16 %v231
  %v284 = vunpack.c.l.b16 %v232
  %v285 = vunpack.c.l.b16 %v233
  %v286 = vunpack.c.l.b16 %v234
  %v287 = vunpack.c.l.b16 %v235
  %v288 = vunpack.c.l.b16 %v236
  %v289 = vunpack.c.l.b16 %v237
  %v290 = vunpack.c.l.b16 %v238
  %v291 = vunpack.c.l.b16 %v239
  %v292 = vunpack.c.l.b16 %v240
  %v293 = vunpack.c.l.b16 %v241
  %v294 = vunpack.c.l.b16 %v242
  %v295 = vunpack.c.l.b16 %v243
  %v296 = vunpack.c.l.b16 %v244
  %v297 = vunpack.c.l.b16 %v245
  %v298 = vunpack.c.l.b16 %v246
  %v299 = vunpack.c.l.b16 %v247
  %v300 = vunpack.c.l.b16 %v248
  %v301 = vunpack.c.l.b16 %v249
  %v302 = vunpack.c.l.b16 %v250
  %v303 = vunpack.c.l.b16 %v251
  %v304 = vpack.c.b16 %v281, %v280
  %v305 = vpack.c.b16 %v283, %v282
  %v306 = vpack.c.b16 %v285, %v284
  %v307 = vpack.c.b16 %v287, %v286
  %v308 = vpack.c.b16 %v289, %v288
  %v309 = vpack.c.b16 %v291, %v290
  %v310 = vpack.c.b16 %v293, %v292
  %v311 = vpack.c.b16 %v295, %v294
  %v312 = vpack.c.b16 %v297, %v296
  %v313 = vpack.c.b16 %v299, %v298
  %v314 = vpack.c.b16 %v301, %v300
  %v315 = vpack.c.b16 %v303, %v302
  %v329 = vsel %vm220, %v219, 0
  %v332 = vsel %vm220, %v218, 0
  %334 = vmatpush.bf16.msra.mxu0 %v311
  %335 = vmatpush.bf16.msra.mxu0 %v310
  %336 = vmatpush.bf16.msra.mxu0 %v309
  %337 = vmatpush.bf16.msra.mxu0 %v308
  %338 = vmatpush.bf16.msra.mxu0 %v307
  %339 = vmatpush.bf16.msra.mxu0 %v306
  %340 = vmatpush.bf16.msra.mxu0 %v305
  %341 = vmatpush.bf16.msra.mxu0 %v304
  %342 = vmatmul.bf16.gmra.mxu0 %v222
  %v343 = vpop.f32.mrf.mxu0
  %v344 = vadd.f32 %v254, %v343
  %v345 = vpop.f32.mrf.mxu0
  %v346 = vadd.f32 %v254, %v345
  %347 = vmatmul.bf16.gmra.mxu0 %v226
  %v348 = vpop.f32.mrf.mxu0
  %v349 = vadd.f32 %v254, %v348
  %v350 = vpop.f32.mrf.mxu0
  %351 = vdwg.mxu0
  %352 = vmatpush.bf16.msra.mxu0 0
  %353 = vmatpush.bf16.msra.mxu0 0
  %354 = vmatpush.bf16.msra.mxu0 0
  %355 = vmatpush.bf16.msra.mxu0 0
  %356 = vmatpush.bf16.msra.mxu0 %v315
  %357 = vmatpush.bf16.msra.mxu0 %v314
  %358 = vmatpush.bf16.msra.mxu0 %v313
  %359 = vmatpush.bf16.msra.mxu0 %v312
  %360 = vmatmul.bf16.gmra.mxu0 %v329
  %v361 = vpop.f32.mrf.mxu0
  %v362 = vadd.f32 %v344, %v361
  %v363 = vpop.f32.mrf.mxu0
  %v364 = vadd.f32 %v346, %v363
  %365 = vmatmul.bf16.gmra.mxu0 %v332
  %v366 = vpop.f32.mrf.mxu0
  %v367 = vadd.f32 %v349, %v366
  %v368 = vpop.f32.mrf.mxu0
  %369 = vdwg.mxu0
  %v370 = vmax.f32 %v362, 0.0
  %v371 = vmax.f32 %v364, 0.0
  %v372 = vmax.f32 %v367, 0.0
  %v373 = vpack.c.bf16 %v370, %v370
  %v374 = vpack.c.bf16 %v371, %v371
  %v375 = vpack.c.bf16 %v372, %v372
  %v377 = vshrl.u32 %v373, 16
  %v379 = vrot.slane %v377, 7
  %v380 = vshll.u32 %v373, 16
  %v382 = vor.u32 %v379, %v380
  %v383 = vrot.slane %v379, 4
  %v386 = vld [vmem:[#allocation3] sm:$0xf]
  %v387 = vsel %vm144, %v382, %v386
  %388 = vst [vmem:[#allocation3] sm:$0xf] %v387
  %v389 = vld [vmem:[#allocation3 + $0x4] sm:$0x1]
  %v390 = vsel %vm150, %v383, %v389
  %391 = vst [vmem:[#allocation3 + $0x4] sm:$0x1] %v390
  %vm392 = vsmask.f32 4368
  %vm393 = vmor %vm149, %vm392
  %v395 = vshrl.u32 %v374, 16
  %v397 = vrot.slane %v395, 7
  %v398 = vshll.u32 %v374, 16
  %v400 = vor.u32 %v397, %v398
  %v401 = vrot.slane %v397, 4
  %v403 = vshrl.u32 %v375, 16
  %v405 = vrot.slane %v403, 7
  %v406 = vshll.u32 %v375, 16
  %v408 = vor.u32 %v405, %v406
  %v409 = vsel %vm393, %v401, %v408
  %v412 = vld [vmem:[#allocation3 + $0x4] sm:$0xe]
  %v413 = vsel %vm167, %v400, %v412
  %414 = vst [vmem:[#allocation3 + $0x4] sm:$0xe] %v413
  %v415 = vld [vmem:[#allocation3 + $0x8] sm:$0x3]
  %v416 = vsel %vm173, %v409, %v415
  %417 = vst [vmem:[#allocation3 + $0x8] sm:$0x3] %v416
  %v418 = vld [vmem:[%s8] sm:$0x3]
  %v419 = vld [vmem:[#allocation3] sm:$0xf]
  %v420 = vld [vmem:[#allocation3 + $0x4] sm:$0xf]
  %v421 = vld [vmem:[#allocation3 + $0x8] sm:$0x1]
  %v422 = vld [vmem:[#allocation3 + $0x8] sm:$0x3]
  %v423 = vld [vmem:[#allocation3] sm:$0xe]
  %v427 = vunpack.c.l.b16 %v419
  %v428 = vunpack.c.l.b16 %v420
  %v429 = vunpack.c.l.b16 %v421
  %v430 = vpack.c.b16 %v428, %v427
  %v431 = vpack.c.b16 %v429, %v429
  %v433 = vunpack.c.l.b16 %v422
  %v434 = vpack.c.b16 %v433, %v433
  %v436 = vshrl.u32 %v430, 16
  %v438 = vshll.u32 %v430, 16
  %v440 = vrot.slane %v438, 1
  %v441 = vor.u32 %v436, %v440
  %v443 = vshll.u32 %v434, 16
  %v445 = vrot.slane %v443, 1
  %v446 = vsel %vm193, %v441, %v445
  %v447 = vshrl.u32 %v434, 16
  %v449 = vor.u32 %v447, %v445
  %450 = vrot.lane.b32.xlu0 %v446, 64
  %v451 = vpop.permute.xlu0 %450
  %452 = vrot.lane.b32.xlu0 %v449, 64
  %v453 = vpop.permute.xlu0 %452
  %v455 = vunpack.c.l.b16 %v423
  %v456 = vpack.c.b16 %v428, %v455
  %v457 = vrot.slane %v456, 1
  %v458 = vrot.slane %v434, 1
  %v459 = vsel %vm216, %v457, %v458
  %v461 = vsel %vm220, %v430, %v451
  %v465 = vsel %vm220, %v431, %v453
  %v467 = vld [vmem:[%s7] sm:$0xff]
  %v468 = vld [vmem:[%s7 + $0x8] sm:$0xff]
  %v469 = vld [vmem:[%s7 + $0x10] sm:$0xff]
  %v470 = vld [vmem:[%s7 + $0x18] sm:$0xff]
  %v471 = vld [vmem:[%s7 + $0x20] sm:$0xff]
  %v472 = vld [vmem:[%s7 + $0x28] sm:$0xff]
  %v473 = vld [vmem:[%s7 + $0x30] sm:$0xff]
  %v474 = vld [vmem:[%s7 + $0x38] sm:$0xff]
  %v475 = vld [vmem:[%s7 + $0x40] sm:$0xff]
  %v476 = vld [vmem:[%s7 + $0x48] sm:$0xff]
  %v477 = vld [vmem:[%s7 + $0x50] sm:$0xff]
  %v478 = vld [vmem:[%s7 + $0x58] sm:$0xff]
  %v479 = vld [vmem:[%s7 + $0x60] sm:$0xff]
  %v480 = vld [vmem:[%s7 + $0x68] sm:$0xff]
  %v481 = vld [vmem:[%s7 + $0x70] sm:$0xff]
  %v482 = vld [vmem:[%s7 + $0x78] sm:$0xff]
  %v483 = vld [vmem:[%s7 + $0x80] sm:$0xff]
  %v484 = vld [vmem:[%s7 + $0x88] sm:$0xff]
  %v485 = vld [vmem:[%s7 + $0x90] sm:$0xff]
  %v486 = vld [vmem:[%s7 + $0x98] sm:$0xff]
  %v487 = vld [vmem:[%s7 + $0xa0] sm:$0xff]
  %v488 = vld [vmem:[%s7 + $0xa8] sm:$0xff]
  %v489 = vld [vmem:[%s7 + $0xb0] sm:$0xff]
  %v490 = vld [vmem:[%s7 + $0xb8] sm:$0xff]
  %v492 = vperm.slane %v418, 0
  %v493 = vperm.slane %v418, 1
  %v520 = vunpack.c.l.b16 %v467
  %v521 = vunpack.c.h.b16 %v467
  %v522 = vunpack.c.l.b16 %v468
  %v523 = vunpack.c.h.b16 %v468
  %v524 = vunpack.c.l.b16 %v469
  %v525 = vunpack.c.h.b16 %v469
  %v526 = vunpack.c.l.b16 %v470
  %v527 = vunpack.c.h.b16 %v470
  %v528 = vunpack.c.l.b16 %v471
  %v529 = vunpack.c.h.b16 %v471
  %v530 = vunpack.c.l.b16 %v472
  %v531 = vunpack.c.h.b16 %v472
  %v532 = vunpack.c.l.b16 %v473
  %v533 = vunpack.c.h.b16 %v473
  %v534 = vunpack.c.l.b16 %v474
  %v535 = vunpack.c.h.b16 %v474
  %v536 = vunpack.c.l.b16 %v475
  %v537 = vunpack.c.h.b16 %v475
  %v538 = vunpack.c.l.b16 %v476
  %v539 = vunpack.c.h.b16 %v476
  %v540 = vunpack.c.l.b16 %v477
  %v541 = vunpack.c.h.b16 %v477
  %v542 = vunpack.c.l.b16 %v478
  %v543 = vunpack.c.h.b16 %v478
  %v544 = vunpack.c.l.b16 %v479
  %v545 = vunpack.c.h.b16 %v479
  %v546 = vunpack.c.l.b16 %v480
  %v547 = vunpack.c.h.b16 %v480
  %v548 = vunpack.c.l.b16 %v481
  %v549 = vunpack.c.h.b16 %v481
  %v550 = vunpack.c.l.b16 %v482
  %v551 = vunpack.c.h.b16 %v482
  %v552 = vunpack.c.l.b16 %v483
  %v553 = vunpack.c.h.b16 %v483
  %v554 = vunpack.c.l.b16 %v484
  %v555 = vunpack.c.h.b16 %v484
  %v556 = vunpack.c.l.b16 %v485
  %v557 = vunpack.c.h.b16 %v485
  %v558 = vunpack.c.l.b16 %v486
  %v559 = vunpack.c.h.b16 %v486
  %v560 = vunpack.c.l.b16 %v487
  %v561 = vunpack.c.h.b16 %v487
  %v562 = vunpack.c.l.b16 %v488
  %v563 = vunpack.c.h.b16 %v488
  %v564 = vunpack.c.l.b16 %v489
  %v565 = vunpack.c.h.b16 %v489
  %v566 = vunpack.c.l.b16 %v490
  %v567 = vunpack.c.h.b16 %v490
  %v568 = vpack.c.b16 %v522, %v520
  %v569 = vpack.c.b16 %v523, %v521
  %v570 = vpack.c.b16 %v526, %v524
  %v571 = vpack.c.b16 %v527, %v525
  %v572 = vpack.c.b16 %v530, %v528
  %v573 = vpack.c.b16 %v531, %v529
  %v574 = vpack.c.b16 %v534, %v532
  %v575 = vpack.c.b16 %v535, %v533
  %v576 = vpack.c.b16 %v538, %v536
  %v577 = vpack.c.b16 %v539, %v537
  %v578 = vpack.c.b16 %v542, %v540
  %v579 = vpack.c.b16 %v543, %v541
  %v580 = vpack.c.b16 %v546, %v544
  %v581 = vpack.c.b16 %v547, %v545
  %v582 = vpack.c.b16 %v550, %v548
  %v583 = vpack.c.b16 %v551, %v549
  %v584 = vpack.c.b16 %v554, %v552
  %v585 = vpack.c.b16 %v555, %v553
  %v586 = vpack.c.b16 %v558, %v556
  %v587 = vpack.c.b16 %v559, %v557
  %v588 = vpack.c.b16 %v562, %v560
  %v589 = vpack.c.b16 %v563, %v561
  %v590 = vpack.c.b16 %v566, %v564
  %v591 = vpack.c.b16 %v567, %v565
  %v617 = vsel %vm220, %v459, 0
  %v620 = vsel %vm220, %v458, 0
  %622 = vmatpush.bf16.msra.mxu0 %v582
  %623 = vmatpush.bf16.msra.mxu0 %v580
  %624 = vmatpush.bf16.msra.mxu0 %v578
  %625 = vmatpush.bf16.msra.mxu0 %v576
  %626 = vmatpush.bf16.msra.mxu0 %v574
  %627 = vmatpush.bf16.msra.mxu0 %v572
  %628 = vmatpush.bf16.msra.mxu0 %v570
  %629 = vmatpush.bf16.msra.mxu0 %v568
  %630 = vmatmul.bf16.gmra.mxu0 %v461
  %v631 = vpop.f32.mrf.mxu0
  %v632 = vadd.f32 %v492, %v631
  %v633 = vpop.f32.mrf.mxu0
  %v634 = vadd.f32 %v492, %v633
  %635 = vmatmul.bf16.gmra.mxu0 %v465
  %v636 = vpop.f32.mrf.mxu0
  %v637 = vadd.f32 %v492, %v636
  %v638 = vpop.f32.mrf.mxu0
  %639 = vdwg.mxu0
  %640 = vmatpush.bf16.msra.mxu0 0
  %641 = vmatpush.bf16.msra.mxu0 0
  %642 = vmatpush.bf16.msra.mxu0 0
  %643 = vmatpush.bf16.msra.mxu0 0
  %644 = vmatpush.bf16.msra.mxu0 %v590
  %645 = vmatpush.bf16.msra.mxu0 %v588
  %646 = vmatpush.bf16.msra.mxu0 %v586
  %647 = vmatpush.bf16.msra.mxu0 %v584
  %648 = vmatmul.bf16.gmra.mxu0 %v617
  %v649 = vpop.f32.mrf.mxu0
  %v650 = vadd.f32 %v632, %v649
  %v651 = vpop.f32.mrf.mxu0
  %v652 = vadd.f32 %v634, %v651
  %653 = vmatmul.bf16.gmra.mxu0 %v620
  %v654 = vpop.f32.mrf.mxu0
  %v655 = vadd.f32 %v637, %v654
  %v656 = vpop.f32.mrf.mxu0
  %657 = vdwg.mxu0
  %658 = vmatpush.bf16.msra.mxu0 %v583
  %659 = vmatpush.bf16.msra.mxu0 %v581
  %660 = vmatpush.bf16.msra.mxu0 %v579
  %661 = vmatpush.bf16.msra.mxu0 %v577
  %662 = vmatpush.bf16.msra.mxu0 %v575
  %663 = vmatpush.bf16.msra.mxu0 %v573
  %664 = vmatpush.bf16.msra.mxu0 %v571
  %665 = vmatpush.bf16.msra.mxu0 %v569
  %666 = vmatmul.bf16.gmra.mxu0 %v461
  %v667 = vpop.f32.mrf.mxu0
  %v668 = vadd.f32 %v493, %v667
  %v669 = vpop.f32.mrf.mxu0
  %v670 = vadd.f32 %v493, %v669
  %671 = vmatmul.bf16.gmra.mxu0 %v465
  %v672 = vpop.f32.mrf.mxu0
  %v673 = vadd.f32 %v493, %v672
  %v674 = vpop.f32.mrf.mxu0
  %675 = vdwg.mxu0
  %676 = vmatpush.bf16.msra.mxu0 0
  %677 = vmatpush.bf16.msra.mxu0 0
  %678 = vmatpush.bf16.msra.mxu0 0
  %679 = vmatpush.bf16.msra.mxu0 0
  %680 = vmatpush.bf16.msra.mxu0 %v591
  %681 = vmatpush.bf16.msra.mxu0 %v589
  %682 = vmatpush.bf16.msra.mxu0 %v587
  %683 = vmatpush.bf16.msra.mxu0 %v585
  %684 = vmatmul.bf16.gmra.mxu0 %v617
  %v685 = vpop.f32.mrf.mxu0
  %v686 = vadd.f32 %v668, %v685
  %v687 = vpop.f32.mrf.mxu0
  %v688 = vadd.f32 %v670, %v687
  %689 = vmatmul.bf16.gmra.mxu0 %v620
  %v690 = vpop.f32.mrf.mxu0
  %v691 = vadd.f32 %v673, %v690
  %v692 = vpop.f32.mrf.mxu0
  %693 = vdwg.mxu0
  %694 = vst [vmem:[%s9] sm:$0xff] %v650
  %695 = vst [vmem:[%s9 + $0x8] sm:$0xff] %v686
  %vm700 = vcmask 1045504
  %v701 = vrot.slane %v652, 2
  %v702 = vrot.slane %v655, 2
  %v703 = vsel %vm700, %v701, %v702
  %v704 = vrot.slane %v688, 2
  %v705 = vrot.slane %v691, 2
  %v706 = vsel %vm700, %v704, %v705
  %709 = vst [vmem:[%s9 + $0x10] sm:$0xff] %v703
  %710 = vst [vmem:[%s9 + $0x18] sm:$0xff] %v706
  // Predicated region
  $region38: #{upblok_forward.1} parent=0 // pred_check
    _
  $region39: #{upblok_forward.1} parent=0 // pred_check_branch
    %712 = sbr.rel (0) target = $region41
  $region40: #{upblok_forward.1} parent=0 // pred_region
    _
  $region41: #{upblok_forward.1} parent=0 // pred_fallthru
    _
  // Predicated region
  $region42: #{upblok_forward.1} parent=0 // pred_check
    _
  $region43: #{upblok_forward.1} parent=0 // pred_check_branch
    %714 = sbr.rel (0) target = $region45
  $region44: #{upblok_forward.1} parent=0 // pred_region
    _
  $region45: #{upblok_forward.1} parent=0 // pred_fallthru
    _

</llo_original>
